<compile_context>
chip_gen: v7x
topology: tpu7x:2x2x1
jax: 0.10.0
libtpu: 0.0.40
codegen_flags: <defaults>
</compile_context>

<pallas_src>
import jax
import jax.numpy as jnp
from jax.experimental import pallas as pl
from jax.experimental.pallas import tpu as pltpu


def attention_kernel(hpre_ref, ann_ref, w1a_ref, w2_ref, ctx_ref):
    # hpre_ref: (TB, H) f32    -- precomputed  hid @ W1_h + b1
    # ann_ref:  (TB, S, A) bf16
    # w1a_ref:  (A, H) bf16
    # w2_ref:   (1, H) f32
    # ctx_ref:  (TB, A) f32
    TB, S, A = ann_ref.shape
    H = hpre_ref.shape[-1]

    # Single upcast of the annotation block; reused by both the MXU path and the
    # f32 context accumulation.  (HBM traffic is bf16; only VMEM/vregs see f32.)
    ann_f32 = ann_ref[...].astype(jnp.float32)                     # (TB, S, A)

    # --- layer 1 (annotation part) on the MXU: bf16 x bf16 -> f32 accumulate ---
    ann_2d = ann_f32.reshape(TB * S, A).astype(jnp.bfloat16)       # (TB*S, A)
    a_proj = jnp.dot(ann_2d, w1a_ref[...],
                     preferred_element_type=jnp.float32)           # (TB*S, H)

    # relu(concat([hid, ann]) @ W1 + b1)  ==  relu(a_proj + (hid @ W1_h + b1))
    z = jnp.maximum(
        a_proj.reshape(TB, S, H) + hpre_ref[...][:, None, :], 0.0)  # (TB, S, H)

    # --- layer 2 (energies): VPU multiply + lane reduce over H.
    # keepdims keeps S on sublanes through the whole softmax (no relayouts).
    # NOTE: '+ b2' is dropped — softmax is shift-invariant, result is identical.
    e = jnp.sum(z * w2_ref[...], axis=-1, keepdims=True)           # (TB, S, 1)

    # --- softmax over the sequence (sublane) axis ---
    m = jnp.max(e, axis=1, keepdims=True)                          # (TB, 1, 1)
    p = jnp.exp(e - m)                                             # (TB, S, 1)
    alpha = p * pl.reciprocal(jnp.sum(p, axis=1, keepdims=True), approx=True)

    # --- context: weighted sum over S, accumulated in f32 ---
    ctx = jnp.sum(alpha * ann_f32, axis=1)                         # (TB, A)
    ctx_ref[...] = ctx.astype(ctx_ref.dtype)


def _round_up(x, m):
    return ((x + m - 1) // m) * m


def _vmem_capacity_bytes():
    """Per-TensorCore VMEM capacity; conservative fallback = v7x's 64 MiB."""
    try:
        info = pltpu.get_tpu_info()
        cap = getattr(info, "vmem_capacity_bytes", None)
        if cap:
            return int(cap)
    except Exception:
        pass
    return 64 * 1024 * 1024


def _block_row_bytes(S, A, H):
    """VMEM bytes per batch row across all per-step blocks (tile-padded)."""
    ann_row = _round_up(S, 16) * _round_up(A, 128) * 2   # bf16, (16,128) tiles
    hpre_row = _round_up(H, 128) * 4                     # f32
    out_row = _round_up(A, 128) * 4                      # f32
    return ann_row + hpre_row + out_row


def _choose_block_b(B, S, A, H, vmem_cap):
    """Fattest batch block that (a) keeps double-buffered blocks well under the
    chip's VMEM (generation-aware, v7x-safe), (b) never exceeds the padded
    batch, and (c) yields >= 2 grid steps when B > 8 so both TensorCores of a
    2-TC chip (v7x) get work under dimension_semantics=('parallel',)."""
    per_row = _block_row_bytes(S, A, H)
    per_block_cap = min(12 * 1024 * 1024, vmem_cap // 5)
    tb = max(8, ((per_block_cap // per_row) // 8) * 8)   # as fat as fits
    tb = min(tb, _round_up(B, 8))                        # don't exceed padded batch
    if B > 8:                                            # guarantee >= 2 grid steps
        tb = min(tb, max(8, _round_up(pl.cdiv(B, 2), 8)))
    return max(tb, 8)


def bahdanau_attention(prev_hidden_state, annotations, params, *, block_b=None):
    """prev_hidden_state: (B, 1, H), annotations: (B, S, A) -> context (B, 1, A)."""
    B, one, H = prev_hidden_state.shape
    assert one == 1
    _, S, A = annotations.shape
    w1h, w1a, b1, w2, b2 = params
    del b2  # softmax is shift-invariant: '+ b2' cannot change the output.

    vmem_cap = _vmem_capacity_bytes()
    tb = block_b if block_b is not None else _choose_block_b(B, S, A, H, vmem_cap)

    # Precompute hid @ W1_h + b1 once per batch row, in f32 (tiny; exact w.r.t.
    # the PyTorch reference, and removes one MXU push + the bias from the kernel).
    hpre = prev_hidden_state.reshape(B, H).astype(jnp.float32) @ w1h.astype(jnp.float32)
    hpre = hpre + b1.reshape(1, H).astype(jnp.float32)

    # Annotations dominate HBM traffic -> store/stream them as bf16.
    ann = annotations.astype(jnp.bfloat16)

    # Pad the batch so the grid tiles it exactly.  Padded rows (zero hpre, zero
    # annotations) produce ctx == 0 with no NaNs and are sliced off below.
    b_pad = pl.cdiv(B, tb) * tb
    if b_pad != B:
        hpre = jnp.pad(hpre, ((0, b_pad - B), (0, 0)))
        ann = jnp.pad(ann, ((0, b_pad - B), (0, 0), (0, 0)))

    w1a_b = w1a.astype(jnp.bfloat16)                 # bf16 weight for the MXU
    w2_row = w2.reshape(1, H).astype(jnp.float32)    # W2 as a lane-dense row

    # VMEM budget derived from the actual double-buffered block footprint
    # (plus weights/slack), clipped to a safe fraction of physical VMEM.
    need = 2 * tb * _block_row_bytes(S, A, H) + 4 * 1024 * 1024
    vmem_limit = int(min(max(need, 16 * 1024 * 1024), int(0.9 * vmem_cap)))

    grid = (b_pad // tb,)
    grid_spec = pltpu.PrefetchScalarGridSpec(
        num_scalar_prefetch=0,
        grid=grid,
        in_specs=[
            pl.BlockSpec((tb, H), lambda b: (b, 0)),        # precomputed hid projection
            pl.BlockSpec((tb, S, A), lambda b: (b, 0, 0)),  # bf16 annotations block
            pl.BlockSpec((A, H), lambda b: (0, 0)),         # W1 (annotation part)
            pl.BlockSpec((1, H), lambda b: (0, 0)),         # W2 row
        ],
        out_specs=pl.BlockSpec((tb, A), lambda b: (b, 0)),  # 2-D output slab
    )

    ctx2d = pl.pallas_call(
        attention_kernel,
        out_shape=jax.ShapeDtypeStruct((b_pad, A), jnp.float32),
        grid_spec=grid_spec,
        compiler_params=pltpu.CompilerParams(
            dimension_semantics=("parallel",),   # shards batch blocks across v7x TCs
            vmem_limit_bytes=vmem_limit,
        ),
    )(hpre, ann, w1a_b, w2_row)

    return ctx2d[:B].reshape(B, 1, A)


def reference_attention(prev_hidden_state, annotations, params):
    """Pure-JAX reference mirroring the PyTorch forward (f32)."""
    w1h, w1a, b1, w2, b2 = params
    B, S, A = annotations.shape
    H = prev_hidden_state.shape[-1]
    hid = jnp.broadcast_to(prev_hidden_state, (B, S, H))
    concat = jnp.concatenate([hid, annotations], axis=2)        # (B, S, H+A)
    w1 = jnp.concatenate([w1h, w1a], axis=0)                    # (H+A, H)
    z = jnp.maximum(concat @ w1 + b1[0], 0.0)                   # (B, S, H)
    e = (z @ w2 + b2[0]).squeeze(-1)                            # (B, S)
    alpha = jax.nn.softmax(e, axis=1)[:, None, :]               # (B, 1, S)
    return alpha @ annotations                                  # (B, 1, A)


def _make_inputs(key, B, S, H, A):
    k_hid, k_ann, k_w1, k_b1, k_w2, k_b2 = jax.random.split(key, 6)
    prev_hidden_state = jax.random.normal(k_hid, (B, 1, H), dtype=jnp.float32)
    annotations = jax.random.normal(k_ann, (B, S, A), dtype=jnp.float32)
    # dense = Linear(H+A, H) -> ReLU -> Linear(H, 1); weights stored (in, out).
    w1_full = jax.random.normal(k_w1, (H + A, H), dtype=jnp.float32) * 0.05
    b1 = jax.random.normal(k_b1, (1, H), dtype=jnp.float32) * 0.05
    w2 = jax.random.normal(k_w2, (H, 1), dtype=jnp.float32) * 0.05
    b2 = jax.random.normal(k_b2, (1, 1), dtype=jnp.float32) * 0.05
    params = (w1_full[:H], w1_full[H:], b1, w2, b2)
    return prev_hidden_state, annotations, params


if __name__ == "__main__":
    B, S, H, A = 2, 8, 32, 16   # batch, seq len, hidden_size, annotation_size

    key = jax.random.PRNGKey(0)
    prev_hidden_state, annotations, params = _make_inputs(key, B, S, H, A)

    ctx = bahdanau_attention(prev_hidden_state, annotations, params)
    ctx = jax.block_until_ready(ctx)
    ref = reference_attention(prev_hidden_state, annotations, params)
    assert ctx.shape == (B, 1, A)
    assert jnp.allclose(ctx, ref, atol=1e-2, rtol=1e-2), (
        f"mismatch vs reference: max abs diff {jnp.max(jnp.abs(ctx - ref))}")

    # Second check: multi-step grid + batch padding path (B not a multiple of TB).
    B2 = 20
    hid2, ann2, params2 = _make_inputs(jax.random.PRNGKey(0), B2, S, H, A)
    ctx2 = jax.block_until_ready(bahdanau_attention(hid2, ann2, params2, block_b=8))
    ref2 = reference_attention(hid2, ann2, params2)
    assert ctx2.shape == (B2, 1, A)
    assert jnp.allclose(ctx2, ref2, atol=1e-2, rtol=1e-2), (
        f"mismatch vs reference (tiled): max abs diff {jnp.max(jnp.abs(ctx2 - ref2))}")

    print("KERNEL_OK")
</pallas_src>

<mosaic_0001>
module attributes {stable_mosaic.version = 11 : i64} {
  func.func @attention_kernel(%arg0: i32, %arg1: memref<8x32xf32, #tpu.memory_space<vmem>>, %arg2: memref<8x8x16xbf16, #tpu.memory_space<vmem>>, %arg3: memref<16x32xbf16, #tpu.memory_space<vmem>>, %arg4: memref<1x32xf32, #tpu.memory_space<vmem>>, %arg5: memref<8x16xf32, #tpu.memory_space<vmem>>) attributes {dimension_semantics = [#tpu.dimension_semantics<parallel>], iteration_bounds = array<i64: 1>, scalar_prefetch = 0 : i64, scratch_operands = 0 : i64, tpu.core_type = #tpu.core_type<tc>, window_params = [{transform_indices = @transform_0, window_bounds = array<i64: 8, 32>}, {transform_indices = @transform_1, window_bounds = array<i64: 8, 8, 16>}, {pipeline_mode = #tpu.pipeline_mode<synchronous>, transform_indices = @transform_2, window_bounds = array<i64: 16, 32>}, {pipeline_mode = #tpu.pipeline_mode<synchronous>, transform_indices = @transform_3, window_bounds = array<i64: 1, 32>}, {transform_indices = @transform_4, window_bounds = array<i64: 8, 16>}]} {
    %c0 = arith.constant 0 : index
    %c0_0 = arith.constant 0 : index
    %c0_1 = arith.constant 0 : index
    %0 = vector.load %arg2[%c0, %c0_0, %c0_1] : memref<8x8x16xbf16, #tpu.memory_space<vmem>>, vector<8x8x16xbf16>
    %1 = arith.extf %0 : vector<8x8x16xbf16> to vector<8x8x16xf32>
    %2 = vector.shape_cast %1 : vector<8x8x16xf32> to vector<64x16xf32>
    %3 = arith.truncf %2 : vector<64x16xf32> to vector<64x16xbf16>
    %c0_2 = arith.constant 0 : index
    %c0_3 = arith.constant 0 : index
    %4 = vector.load %arg3[%c0_2, %c0_3] : memref<16x32xbf16, #tpu.memory_space<vmem>>, vector<16x32xbf16>
    %cst = arith.constant dense<0.000000e+00> : vector<64x32xf32>
    %5 = tpu.matmul %3, %4, %cst {dimension_numbers = #tpu.dot_dimension_numbers<[1], [0], [0], [1], [0, 0, 1, 1], [], []>} : vector<64x16xbf16>, vector<16x32xbf16>, vector<64x32xf32> -> vector<64x32xf32>
    %6 = vector.shape_cast %5 : vector<64x32xf32> to vector<8x8x32xf32>
    %c0_4 = arith.constant 0 : index
    %c0_5 = arith.constant 0 : index
    %7 = vector.load %arg1[%c0_4, %c0_5] : memref<8x32xf32, #tpu.memory_space<vmem>>, vector<8x32xf32>
    %8 = vector.shape_cast %7 : vector<8x32xf32> to vector<8x1x32xf32>
    %9 = vector.broadcast %8 : vector<8x1x32xf32> to vector<8x8x32xf32>
    %10 = arith.addf %6, %9 : vector<8x8x32xf32>
    %cst_6 = arith.constant 0.000000e+00 : f32
    %11 = vector.broadcast %cst_6 : f32 to vector<8x8x32xf32>
    %12 = arith.maximumf %10, %11 : vector<8x8x32xf32>
    %c0_7 = arith.constant 0 : index
    %c0_8 = arith.constant 0 : index
    %13 = vector.load %arg4[%c0_7, %c0_8] : memref<1x32xf32, #tpu.memory_space<vmem>>, vector<1x32xf32>
    %14 = vector.shape_cast %13 : vector<1x32xf32> to vector<1x1x32xf32>
    %15 = vector.broadcast %14 : vector<1x1x32xf32> to vector<8x8x32xf32>
    %16 = arith.mulf %12, %15 : vector<8x8x32xf32>
    %cst_9 = arith.constant dense<0.000000e+00> : vector<8x8xf32>
    %17 = vector.multi_reduction <add>, %16, %cst_9 [2] : vector<8x8x32xf32> to vector<8x8xf32>
    %18 = vector.shape_cast %17 : vector<8x8xf32> to vector<8x8x1xf32>
    %cst_10 = arith.constant dense<0xFF800000> : vector<8x1xf32>
    %19 = vector.multi_reduction <maximumf>, %18, %cst_10 [1] : vector<8x8x1xf32> to vector<8x1xf32>
    %20 = vector.shape_cast %19 : vector<8x1xf32> to vector<8x1x1xf32>
    %21 = vector.broadcast %20 : vector<8x1x1xf32> to vector<8x8x1xf32>
    %22 = arith.subf %18, %21 : vector<8x8x1xf32>
    %23 = math.exp %22 : vector<8x8x1xf32>
    %cst_11 = arith.constant dense<0.000000e+00> : vector<8x1xf32>
    %24 = vector.multi_reduction <add>, %23, %cst_11 [1] : vector<8x8x1xf32> to vector<8x1xf32>
    %25 = vector.shape_cast %24 : vector<8x1xf32> to vector<8x1x1xf32>
    %26 = tpu.reciprocal %25 {approx = true} : vector<8x1x1xf32> -> vector<8x1x1xf32>
    %27 = vector.broadcast %26 : vector<8x1x1xf32> to vector<8x8x1xf32>
    %28 = arith.mulf %23, %27 : vector<8x8x1xf32>
    %29 = vector.broadcast %28 : vector<8x8x1xf32> to vector<8x8x16xf32>
    %30 = arith.mulf %29, %1 : vector<8x8x16xf32>
    %cst_12 = arith.constant dense<0.000000e+00> : vector<8x16xf32>
    %31 = vector.multi_reduction <add>, %30, %cst_12 [1] : vector<8x8x16xf32> to vector<8x16xf32>
    %c0_13 = arith.constant 0 : index
    %c0_14 = arith.constant 0 : index
    %32 = vector.load %arg5[%c0_13, %c0_14] : memref<8x16xf32, #tpu.memory_space<vmem>>, vector<8x16xf32>
    tpu.vector_store %arg5[%c0_13, %c0_14], %31 {strides = array<i32>} : memref<8x16xf32, #tpu.memory_space<vmem>>, vector<8x16xf32>,
    return
  }
  func.func @transform_0(%arg0: i32) -> (i32, i32) {
    %c0_i32 = arith.constant 0 : i32
    %c0_i32_0 = arith.constant 0 : i32
    return %arg0, %c0_i32 : i32, i32
  }
  func.func @transform_1(%arg0: i32) -> (i32, i32, i32) {
    %c0_i32 = arith.constant 0 : i32
    %c0_i32_0 = arith.constant 0 : i32
    %c0_i32_1 = arith.constant 0 : i32
    return %arg0, %c0_i32, %c0_i32_0 : i32, i32, i32
  }
  func.func @transform_2(%arg0: i32) -> (i32, i32) {
    %c0_i32 = arith.constant 0 : i32
    %c0_i32_0 = arith.constant 0 : i32
    %c0_i32_1 = arith.constant 0 : i32
    return %c0_i32, %c0_i32_0 : i32, i32
  }
  func.func @transform_3(%arg0: i32) -> (i32, i32) {
    %c0_i32 = arith.constant 0 : i32
    %c0_i32_0 = arith.constant 0 : i32
    %c0_i32_1 = arith.constant 0 : i32
    return %c0_i32, %c0_i32_0 : i32, i32
  }
  func.func @transform_4(%arg0: i32) -> (i32, i32) {
    %c0_i32 = arith.constant 0 : i32
    %c0_i32_0 = arith.constant 0 : i32
    return %arg0, %c0_i32 : i32, i32
  }
}

</mosaic_0001>

<llo_original>
// kernel: tpu_custom_call.1
$region0: #{tpu_custom_call.1}
  #allocation0 [shape = 'u32[]', space=smem, size = 0x4, offset = 0x4, fixed_abs, tag = 'smem constant byte address 0x4 - core index']
  #allocation1 [shape = 'u32[144,128]{1,0:T(1,128)}', space=vmem, size = 0x12000, scoped, tag = 'internal scratch']
  %s0 = inlined_call_operand.hbm [shape: f32[8,32], index: 0, kind: input, shape index: {}]
  %s1 = inlined_call_operand.hbm [shape: bf16[8,8,16], index: 1, kind: input, shape index: {}]
  %s2 = inlined_call_operand.hbm [shape: bf16[16,32], index: 2, kind: input, shape index: {}]
  %s3 = inlined_call_operand.vmem [shape: f32[1,32], index: 3, kind: input, shape index: {}]
  %s4 = inlined_call_operand.hbm [shape: f32[8,16], index: 4, kind: output, shape index: {}]
  %s5 = sld [smem:[#allocation0]]
  $region38: #{tpu_custom_call.1} parent=0
    _
  %s7 = ssub.s32 1, %s5
  %s8 = scalar_select 0, %s7, %s5
  $region1: #{tpu_custom_call.1} parent=0
    #allocation2 [shape = 'u8[4096]{0}', space=vmem, size = 0x1000, scoped, tag = 'input window, operand 0, single buffered']
    #allocation3 [shape = 's32[1]{0}', space=sflag, size = 0x4, scoped, tag = 'scoped memory for tpu_custom_call.1']
    #allocation4 [shape = 's32[1]{0}', space=sflag, size = 0x4, scoped, tag = 'scoped memory for tpu_custom_call.1']
    #allocation5 [shape = 'u8[16384]{0}', space=vmem, size = 0x4000, scoped, tag = 'input window, operand 1, single buffered']
    #allocation6 [shape = 's32[1]{0}', space=sflag, size = 0x4, scoped, tag = 'scoped memory for tpu_custom_call.1']
    #allocation7 [shape = 'u8[4096]{0}', space=vmem, size = 0x1000, scoped, tag = 'input window, operand 2, single buffered']
    #allocation8 [shape = 'u8[4096]{0}', space=vmem, size = 0x1000, scoped, tag = 'output window, operand 0, single buffered']
    %9 = vsyncpa [#allocation3], 0
    %10 = vsyncpa [#allocation6], 0
    %11 = vsyncpa [#allocation4], 0
    // Predicated region
    $region2: #{tpu_custom_call.1} parent=1 // pred_check
      _
    $region3: #{tpu_custom_call.1} parent=1 // pred_check_branch
      %13 = sbr.rel (0) target = $region5
    $region4: #{tpu_custom_call.1} parent=1 // pred_region
      %s15 = ssub.s32 128, 128
      %16 = vsyncadd [#allocation3], %s15
      %s18 = sshll.u32 [#allocation2], 4
      %s19 = int_to_ptr.vmem [resolvable:$true] %s18
      %21 = dma.hbm_to_vmem [thread:$0]  %s0, 128, %s19, [#allocation3]
    $region5: #{tpu_custom_call.1} parent=1 // pred_fallthru
      _
    // Predicated region
    $region6: #{tpu_custom_call.1} parent=1 // pred_check
      _
    $region7: #{tpu_custom_call.1} parent=1 // pred_check_branch
      %23 = sbr.rel (0) target = $region9
    $region8: #{tpu_custom_call.1} parent=1 // pred_region
      %s25 = ssub.s32 512, 512
      %26 = vsyncadd [#allocation6], %s25
      %s27 = sshll.u32 [#allocation5], 4
      %s28 = int_to_ptr.vmem [resolvable:$true] %s27
      %33 = dma.hbm_to_vmem [thread:$0]  %s1, 512, %s28, [#allocation6], 64, 64, 4
    $region9: #{tpu_custom_call.1} parent=1 // pred_fallthru
      _
    // Predicated region
    $region10: #{tpu_custom_call.1} parent=1 // pred_check
      _
    $region11: #{tpu_custom_call.1} parent=1 // pred_check_branch
      %35 = sbr.rel (0) target = $region13
    $region12: #{tpu_custom_call.1} parent=1 // pred_region
      %s37 = ssub.s32 128, 128
      %38 = vsyncadd [#allocation6], %s37
      %s39 = sshll.u32 [#allocation7], 4
      %s40 = int_to_ptr.vmem [resolvable:$true] %s39
      %45 = dma.hbm_to_vmem [thread:$0]  %s2, 128, %s40, [#allocation6], 64, 64, 4
    $region13: #{tpu_custom_call.1} parent=1 // pred_fallthru
      _
    // Predicated region
    $region14: #{tpu_custom_call.1} parent=1 // pred_check
      _
    $region15: #{tpu_custom_call.1} parent=1 // pred_check_branch
      %47 = sbr.rel (0) target = $region17
    $region16: #{tpu_custom_call.1} parent=1 // pred_region
      _
    $region17: #{tpu_custom_call.1} parent=1 // pred_fallthru
      _
    // Predicated region
    $region18: #{tpu_custom_call.1} parent=1 // pred_check
      _
    $region19: #{tpu_custom_call.1} parent=1 // pred_check_branch
      %49 = sbr.rel (0) target = $region21
    $region20: #{tpu_custom_call.1} parent=1 // pred_region
      %50 = dma.done [#allocation3], 128
    $region21: #{tpu_custom_call.1} parent=1 // pred_fallthru
      _
    // Predicated region
    $region22: #{tpu_custom_call.1} parent=1 // pred_check
      _
    $region23: #{tpu_custom_call.1} parent=1 // pred_check_branch
      %52 = sbr.rel (0) target = $region25
    $region24: #{tpu_custom_call.1} parent=1 // pred_region
      %53 = dma.done [#allocation6], 512
    $region25: #{tpu_custom_call.1} parent=1 // pred_fallthru
      _
    // Predicated region
    $region26: #{tpu_custom_call.1} parent=1 // pred_check
      _
    $region27: #{tpu_custom_call.1} parent=1 // pred_check_branch
      %55 = sbr.rel (0) target = $region29
    $region28: #{tpu_custom_call.1} parent=1 // pred_region
      %56 = dma.done [#allocation6], 128
    $region29: #{tpu_custom_call.1} parent=1 // pred_fallthru
      _
    %v58 = vld [vmem:[#allocation5] sm:$0xf]
    %v59 = vld [vmem:[#allocation5 + $0x4] sm:$0xf]
    %v60 = vld [vmem:[#allocation5 + $0x8] sm:$0xf]
    %v61 = vld [vmem:[#allocation5 + $0xc] sm:$0xf]
    %v62 = vld [vmem:[#allocation5 + $0x10] sm:$0xf]
    %v63 = vld [vmem:[#allocation5 + $0x14] sm:$0xf]
    %v64 = vld [vmem:[#allocation5 + $0x18] sm:$0xf]
    %v65 = vld [vmem:[#allocation5 + $0x1c] sm:$0xf]
    %v66 = vunpack.c.l.bf16 %v58
    %v67 = vunpack.c.l.bf16 %v59
    %v68 = vunpack.c.l.bf16 %v60
    %v69 = vunpack.c.l.bf16 %v61
    %v70 = vunpack.c.l.bf16 %v62
    %v71 = vunpack.c.l.bf16 %v63
    %v72 = vunpack.c.l.bf16 %v64
    %v73 = vunpack.c.l.bf16 %v65
    %v74 = vpack.c.bf16 %v67, %v66
    %v75 = vpack.c.bf16 %v69, %v68
    %v76 = vpack.c.bf16 %v71, %v70
    %v77 = vpack.c.bf16 %v73, %v72
    %v78 = vld [vmem:[#allocation7] sm:$0xf]
    %v79 = vld [vmem:[#allocation7 + $0x4] sm:$0xf]
    %v82 = vunpack.c.l.b16 %v78
    %v83 = vunpack.c.l.b16 %v79
    %v84 = vpack.c.b16 %v83, %v82
    %vm86 = vcmask 130048
    %v88 = vsel %vm86, %v74, 0
    %v91 = vsel %vm86, %v75, 0
    %v94 = vsel %vm86, %v76, 0
    %v97 = vsel %vm86, %v77, 0
    %99 = vmatprep.subr.bf16.mxu0 0
    %100 = vmatpush1.bf16.msra.mxu0 %v84
    %101 = vmatprep.subr.bf16.mxu0 0
    %102 = vmatpush1.bf16.msra.mxu0 0
    %103 = vmatprep.subr.bf16.mxu0 0
    %104 = vmatpush1.bf16.msra.mxu0 0
    %105 = vmatprep.subr.bf16.mxu0 0
    %106 = vmatpush1.bf16.msra.mxu0 0
    %107 = vmatprep.subr.bf16.mxu0 0
    %108 = vmatpush1.bf16.msra.mxu0 0
    %109 = vmatprep.subr.bf16.mxu0 0
    %110 = vmatpush1.bf16.msra.mxu0 0
    %111 = vmatprep.subr.bf16.mxu0 0
    %112 = vmatpush1.bf16.msra.mxu0 0
    %113 = vmatprep.subr.bf16.mxu0 0
    %114 = vmatpush1.bf16.msra.mxu0 0
    %115 = vmatprep.subr.bf16.mxu0 0
    %116 = vmatpush1.bf16.msra.mxu0 0
    %117 = vmatprep.subr.bf16.mxu0 0
    %118 = vmatpush1.bf16.msra.mxu0 0
    %119 = vmatprep.subr.bf16.mxu0 0
    %120 = vmatpush1.bf16.msra.mxu0 0
    %121 = vmatprep.subr.bf16.mxu0 0
    %122 = vmatpush1.bf16.msra.mxu0 0
    %123 = vmatprep.subr.bf16.mxu0 0
    %124 = vmatpush1.bf16.msra.mxu0 0
    %125 = vmatprep.subr.bf16.mxu0 0
    %126 = vmatpush1.bf16.msra.mxu0 0
    %127 = vmatprep.subr.bf16.mxu0 0
    %128 = vmatpush1.bf16.msra.mxu0 0
    %129 = vmatprep.subr.bf16.mxu0 0
    %130 = vmatpush1.bf16.msra.mxu0 0
    %131 = vmatprep.mubr.bf16.mxu0 0
    %132 = vmatmul.mubr.bf16.gmra.mrb[0].mxu0 %v88
    %v133 = vpop.f32.mrb[0].mxu0
    %v134 = vadd.f32 0.0, %v133
    %v135 = vpop.f32.mrb[0].mxu0
    %v136 = vpop.f32.mrb[0].mxu0
    %v137 = vadd.f32 0.0, %v136
    %v138 = vpop.f32.mrb[0].mxu0
    %139 = vmatprep.mubr.bf16.mxu0 0
    %140 = vmatmul.mubr.bf16.gmra.mrb[0].mxu0 %v91
    %v141 = vpop.f32.mrb[0].mxu0
    %v142 = vadd.f32 0.0, %v141
    %v143 = vpop.f32.mrb[0].mxu0
    %v144 = vpop.f32.mrb[0].mxu0
    %v145 = vadd.f32 0.0, %v144
    %v146 = vpop.f32.mrb[0].mxu0
    %147 = vmatprep.mubr.bf16.mxu0 0
    %148 = vmatmul.mubr.bf16.gmra.mrb[0].mxu0 %v94
    %v149 = vpop.f32.mrb[0].mxu0
    %v150 = vadd.f32 0.0, %v149
    %v151 = vpop.f32.mrb[0].mxu0
    %v152 = vpop.f32.mrb[0].mxu0
    %v153 = vadd.f32 0.0, %v152
    %v154 = vpop.f32.mrb[0].mxu0
    %155 = vmatprep.mubr.bf16.mxu0 0
    %156 = vmatmul.mubr.bf16.gmra.mrb[0].mxu0 %v97
    %v157 = vpop.f32.mrb[0].mxu0
    %v158 = vadd.f32 0.0, %v157
    %v159 = vpop.f32.mrb[0].mxu0
    %v160 = vpop.f32.mrb[0].mxu0
    %v161 = vadd.f32 0.0, %v160
    %v162 = vpop.f32.mrb[0].mxu0
    %163 = vdwg.mxu0
    %v164 = vld [vmem:[#allocation2] sm:$0xff]
    %v166 = vcombine.high %v164, %v164
    %v168 = vunpack.c.l.s4 1966171168
    %v169 = vunpack.c.0.s8 %v168
    %v170 = vlaneseq
    %v171 = vshrl.u32 %v170, 7
    %v172 = vsub.s32 %v169, %v171
    %v173 = vrot.slane %v164, %v172
    %v175 = vunpack.c.l.s4 1966171168
    %v176 = vunpack.c.0.s8 %v175
    %v177 = vlaneseq
    %v178 = vshrl.u32 %v177, 7
    %v179 = vsub.s32 %v176, %v178
    %v180 = vrot.slane %v166, %v179
    %v181 = vcombine.high %v173, %v173
    %v182 = vcombine.high %v180, %v180
    %v184 = vunpack.c.l.s4 1966171168
    %v185 = vunpack.c.0.s8 %v184
    %v186 = vlaneseq
    %v187 = vshrl.u32 %v186, 7
    %v188 = vsub.s32 %v185, %v187
    %v189 = vrot.slane %v173, %v188
    %v191 = vunpack.c.l.s4 1966171168
    %v192 = vunpack.c.0.s8 %v191
    %v193 = vlaneseq
    %v194 = vshrl.u32 %v193, 7
    %v195 = vsub.s32 %v192, %v194
    %v196 = vrot.slane %v180, %v195
    %v198 = vunpack.c.l.s4 1966171168
    %v199 = vunpack.c.0.s8 %v198
    %v200 = vlaneseq
    %v201 = vshrl.u32 %v200, 7
    %v202 = vsub.s32 %v199, %v201
    %v203 = vrot.slane %v181, %v202
    %v205 = vunpack.c.l.s4 1966171168
    %v206 = vunpack.c.0.s8 %v205
    %v207 = vlaneseq
    %v208 = vshrl.u32 %v207, 7
    %v209 = vsub.s32 %v206, %v208
    %v210 = vrot.slane %v182, %v209
    %v211 = vcombine.high %v189, %v189
    %v212 = vcombine.high %v196, %v196
    %v213 = vcombine.high %v203, %v203
    %v214 = vcombine.high %v210, %v210
    %v215 = vlaneseq
    %v216 = vshrl.u32 %v215, 7
    %v217 = vsub.s32 0, %v216
    %v218 = vrot.slane %v189, %v217
    %v219 = vlaneseq
    %v220 = vshrl.u32 %v219, 7
    %v221 = vsub.s32 0, %v220
    %v222 = vrot.slane %v203, %v221
    %v223 = vlaneseq
    %v224 = vshrl.u32 %v223, 7
    %v225 = vsub.s32 0, %v224
    %v226 = vrot.slane %v211, %v225
    %v227 = vlaneseq
    %v228 = vshrl.u32 %v227, 7
    %v229 = vsub.s32 0, %v228
    %v230 = vrot.slane %v213, %v229
    %v231 = vlaneseq
    %v232 = vshrl.u32 %v231, 7
    %v233 = vsub.s32 0, %v232
    %v234 = vrot.slane %v196, %v233
    %v235 = vlaneseq
    %v236 = vshrl.u32 %v235, 7
    %v237 = vsub.s32 0, %v236
    %v238 = vrot.slane %v210, %v237
    %v239 = vlaneseq
    %v240 = vshrl.u32 %v239, 7
    %v241 = vsub.s32 0, %v240
    %v242 = vrot.slane %v212, %v241
    %v243 = vlaneseq
    %v244 = vshrl.u32 %v243, 7
    %v245 = vsub.s32 0, %v244
    %v246 = vrot.slane %v214, %v245
    %v255 = vadd.f32 %v134, %v218
    %v256 = vadd.f32 %v137, %v222
    %v257 = vadd.f32 %v142, %v226
    %v258 = vadd.f32 %v145, %v230
    %v259 = vadd.f32 %v150, %v234
    %v260 = vadd.f32 %v153, %v238
    %v261 = vadd.f32 %v158, %v242
    %v262 = vadd.f32 %v161, %v246
    %v263 = vmax.f32 %v255, 0.0
    %v264 = vmax.f32 %v256, 0.0
    %v265 = vmax.f32 %v257, 0.0
    %v266 = vmax.f32 %v258, 0.0
    %v267 = vmax.f32 %v259, 0.0
    %v268 = vmax.f32 %v260, 0.0
    %v269 = vmax.f32 %v261, 0.0
    %v270 = vmax.f32 %v262, 0.0
    %v271 = vld [vmem:[%s3] sm:$0x1]
    %v273 = vlaneseq
    %v274 = vshrl.u32 %v273, 7
    %v275 = vsub.s32 0, %v274
    %v276 = vrot.slane %v271, %v275
    %v278 = vmul.f32 %v263, %v276
    %v279 = vmul.f32 %v264, %v276
    %v280 = vmul.f32 %v265, %v276
    %v281 = vmul.f32 %v266, %v276
    %v282 = vmul.f32 %v267, %v276
    %v283 = vmul.f32 %v268, %v276
    %v284 = vmul.f32 %v269, %v276
    %v285 = vmul.f32 %v270, %v276
    %vm286 = vcmask 261120
    %v287 = vsel %vm286, %v278, 0.0
    %288 = vadd.xlane.f32.xlu0 %v287
    %v289 = vpop.xlane.xlu0 %288
    %v290 = vsel %vm286, %v279, 0.0
    %291 = vadd.xlane.f32.xlu0 %v290
    %v292 = vpop.xlane.xlu0 %291
    %v293 = vsel %vm286, %v280, 0.0
    %294 = vadd.xlane.f32.xlu0 %v293
    %v295 = vpop.xlane.xlu0 %294
    %v296 = vsel %vm286, %v281, 0.0
    %297 = vadd.xlane.f32.xlu0 %v296
    %v298 = vpop.xlane.xlu0 %297
    %v299 = vsel %vm286, %v282, 0.0
    %300 = vadd.xlane.f32.xlu0 %v299
    %v301 = vpop.xlane.xlu0 %300
    %v302 = vsel %vm286, %v283, 0.0
    %303 = vadd.xlane.f32.xlu0 %v302
    %v304 = vpop.xlane.xlu0 %303
    %v305 = vsel %vm286, %v284, 0.0
    %306 = vadd.xlane.f32.xlu0 %v305
    %v307 = vpop.xlane.xlu0 %306
    %v308 = vsel %vm286, %v285, 0.0
    %309 = vadd.xlane.f32.xlu0 %v308
    %v310 = vpop.xlane.xlu0 %309
    %v311 = vrot.slane %v289, 4
    %v312 = vmax.f32 %v289, %v311
    %v313 = vrot.slane %v312, 2
    %v314 = vmax.f32 %v312, %v313
    %v315 = vrot.slane %v314, 1
    %v316 = vmax.f32 %v314, %v315
    %v317 = vrot.slane %v292, 4
    %v318 = vmax.f32 %v292, %v317
    %v319 = vrot.slane %v318, 2
    %v320 = vmax.f32 %v318, %v319
    %v321 = vrot.slane %v320, 1
    %v322 = vmax.f32 %v320, %v321
    %v323 = vrot.slane %v295, 4
    %v324 = vmax.f32 %v295, %v323
    %v325 = vrot.slane %v324, 2
    %v326 = vmax.f32 %v324, %v325
    %v327 = vrot.slane %v326, 1
    %v328 = vmax.f32 %v326, %v327
    %v329 = vrot.slane %v298, 4
    %v330 = vmax.f32 %v298, %v329
    %v331 = vrot.slane %v330, 2
    %v332 = vmax.f32 %v330, %v331
    %v333 = vrot.slane %v332, 1
    %v334 = vmax.f32 %v332, %v333
    %v335 = vrot.slane %v301, 4
    %v336 = vmax.f32 %v301, %v335
    %v337 = vrot.slane %v336, 2
    %v338 = vmax.f32 %v336, %v337
    %v339 = vrot.slane %v338, 1
    %v340 = vmax.f32 %v338, %v339
    %v341 = vrot.slane %v304, 4
    %v342 = vmax.f32 %v304, %v341
    %v343 = vrot.slane %v342, 2
    %v344 = vmax.f32 %v342, %v343
    %v345 = vrot.slane %v344, 1
    %v346 = vmax.f32 %v344, %v345
    %v347 = vrot.slane %v307, 4
    %v348 = vmax.f32 %v307, %v347
    %v349 = vrot.slane %v348, 2
    %v350 = vmax.f32 %v348, %v349
    %v351 = vrot.slane %v350, 1
    %v352 = vmax.f32 %v350, %v351
    %v353 = vrot.slane %v310, 4
    %v354 = vmax.f32 %v310, %v353
    %v355 = vrot.slane %v354, 2
    %v356 = vmax.f32 %v354, %v355
    %v357 = vrot.slane %v356, 1
    %v358 = vmax.f32 %v356, %v357
    %v359 = vsub.f32 %v289, %v316
    %v360 = vsub.f32 %v292, %v322
    %v361 = vsub.f32 %v295, %v328
    %v362 = vsub.f32 %v298, %v334
    %v363 = vsub.f32 %v301, %v340
    %v364 = vsub.f32 %v304, %v346
    %v365 = vsub.f32 %v307, %v352
    %v366 = vsub.f32 %v310, %v358
    %v367 = vmul.f32 %v359, 1.442695
    %v368 = vpow.pop %v367
    %v369 = vmul.f32 %v360, 1.442695
    %v370 = vpow.pop %v369
    %v371 = vmul.f32 %v361, 1.442695
    %v372 = vpow.pop %v371
    %v373 = vmul.f32 %v362, 1.442695
    %v374 = vpow.pop %v373
    %v375 = vmul.f32 %v363, 1.442695
    %v376 = vpow.pop %v375
    %v377 = vmul.f32 %v364, 1.442695
    %v378 = vpow.pop %v377
    %v379 = vmul.f32 %v365, 1.442695
    %v380 = vpow.pop %v379
    %v381 = vmul.f32 %v366, 1.442695
    %v382 = vpow.pop %v381
    %v383 = vrot.slane %v368, 4
    %v384 = vadd.f32 %v368, %v383
    %v385 = vrot.slane %v384, 2
    %v386 = vadd.f32 %v384, %v385
    %v387 = vrot.slane %v386, 1
    %v388 = vadd.f32 %v386, %v387
    %v389 = vrot.slane %v370, 4
    %v390 = vadd.f32 %v370, %v389
    %v391 = vrot.slane %v390, 2
    %v392 = vadd.f32 %v390, %v391
    %v393 = vrot.slane %v392, 1
    %v394 = vadd.f32 %v392, %v393
    %v395 = vrot.slane %v372, 4
    %v396 = vadd.f32 %v372, %v395
    %v397 = vrot.slane %v396, 2
    %v398 = vadd.f32 %v396, %v397
    %v399 = vrot.slane %v398, 1
    %v400 = vadd.f32 %v398, %v399
    %v401 = vrot.slane %v374, 4
    %v402 = vadd.f32 %v374, %v401
    %v403 = vrot.slane %v402, 2
    %v404 = vadd.f32 %v402, %v403
    %v405 = vrot.slane %v404, 1
    %v406 = vadd.f32 %v404, %v405
    %v407 = vrot.slane %v376, 4
    %v408 = vadd.f32 %v376, %v407
    %v409 = vrot.slane %v408, 2
    %v410 = vadd.f32 %v408, %v409
    %v411 = vrot.slane %v410, 1
    %v412 = vadd.f32 %v410, %v411
    %v413 = vrot.slane %v378, 4
    %v414 = vadd.f32 %v378, %v413
    %v415 = vrot.slane %v414, 2
    %v416 = vadd.f32 %v414, %v415
    %v417 = vrot.slane %v416, 1
    %v418 = vadd.f32 %v416, %v417
    %v419 = vrot.slane %v380, 4
    %v420 = vadd.f32 %v380, %v419
    %v421 = vrot.slane %v420, 2
    %v422 = vadd.f32 %v420, %v421
    %v423 = vrot.slane %v422, 1
    %v424 = vadd.f32 %v422, %v423
    %v425 = vrot.slane %v382, 4
    %v426 = vadd.f32 %v382, %v425
    %v427 = vrot.slane %v426, 2
    %v428 = vadd.f32 %v426, %v427
    %v429 = vrot.slane %v428, 1
    %v430 = vadd.f32 %v428, %v429
    %v431 = vrcp.pop %v388
    %v432 = vrcp.pop %v394
    %v433 = vrcp.pop %v400
    %v434 = vrcp.pop %v406
    %v435 = vrcp.pop %v412
    %v436 = vrcp.pop %v418
    %v437 = vrcp.pop %v424
    %v438 = vrcp.pop %v430
    %v439 = vmul.f32 %v368, %v431
    %v440 = vmul.f32 %v370, %v432
    %v441 = vmul.f32 %v372, %v433
    %v442 = vmul.f32 %v374, %v434
    %v443 = vmul.f32 %v376, %v435
    %v444 = vmul.f32 %v378, %v436
    %v445 = vmul.f32 %v380, %v437
    %v446 = vmul.f32 %v382, %v438
    %v447 = vmul.f32 %v439, %v66
    %v448 = vmul.f32 %v440, %v67
    %v449 = vmul.f32 %v441, %v68
    %v450 = vmul.f32 %v442, %v69
    %v451 = vmul.f32 %v443, %v70
    %v452 = vmul.f32 %v444, %v71
    %v453 = vmul.f32 %v445, %v72
    %v454 = vmul.f32 %v446, %v73
    %v455 = vsel %vm86, %v447, 0.0
    %v456 = vrot.slane %v455, 4
    %v457 = vadd.f32 %v455, %v456
    %v458 = vrot.slane %v457, 2
    %v459 = vadd.f32 %v457, %v458
    %v460 = vrot.slane %v459, 1
    %v461 = vadd.f32 %v459, %v460
    %v462 = vsel %vm86, %v448, 0.0
    %v463 = vrot.slane %v462, 4
    %v464 = vadd.f32 %v462, %v463
    %v465 = vrot.slane %v464, 2
    %v466 = vadd.f32 %v464, %v465
    %v467 = vrot.slane %v466, 1
    %v468 = vadd.f32 %v466, %v467
    %v469 = vsel %vm86, %v449, 0.0
    %v470 = vrot.slane %v469, 4
    %v471 = vadd.f32 %v469, %v470
    %v472 = vrot.slane %v471, 2
    %v473 = vadd.f32 %v471, %v472
    %v474 = vrot.slane %v473, 1
    %v475 = vadd.f32 %v473, %v474
    %v476 = vsel %vm86, %v450, 0.0
    %v477 = vrot.slane %v476, 4
    %v478 = vadd.f32 %v476, %v477
    %v479 = vrot.slane %v478, 2
    %v480 = vadd.f32 %v478, %v479
    %v481 = vrot.slane %v480, 1
    %v482 = vadd.f32 %v480, %v481
    %v483 = vsel %vm86, %v451, 0.0
    %v484 = vrot.slane %v483, 4
    %v485 = vadd.f32 %v483, %v484
    %v486 = vrot.slane %v485, 2
    %v487 = vadd.f32 %v485, %v486
    %v488 = vrot.slane %v487, 1
    %v489 = vadd.f32 %v487, %v488
    %v490 = vsel %vm86, %v452, 0.0
    %v491 = vrot.slane %v490, 4
    %v492 = vadd.f32 %v490, %v491
    %v493 = vrot.slane %v492, 2
    %v494 = vadd.f32 %v492, %v493
    %v495 = vrot.slane %v494, 1
    %v496 = vadd.f32 %v494, %v495
    %v497 = vsel %vm86, %v453, 0.0
    %v498 = vrot.slane %v497, 4
    %v499 = vadd.f32 %v497, %v498
    %v500 = vrot.slane %v499, 2
    %v501 = vadd.f32 %v499, %v500
    %v502 = vrot.slane %v501, 1
    %v503 = vadd.f32 %v501, %v502
    %v504 = vsel %vm86, %v454, 0.0
    %v505 = vrot.slane %v504, 4
    %v506 = vadd.f32 %v504, %v505
    %v507 = vrot.slane %v506, 2
    %v508 = vadd.f32 %v506, %v507
    %v509 = vrot.slane %v508, 1
    %v510 = vadd.f32 %v508, %v509
    %vm519 = vcmask 1041409
    %v520 = vsel %vm519, %v468, %v461
    %vm521 = vcmask 1042434
    %v522 = vsel %vm521, %v475, %v520
    %vm523 = vcmask 1043459
    %v524 = vsel %vm523, %v482, %v522
    %vm525 = vcmask 1044484
    %v526 = vsel %vm525, %v489, %v524
    %vm527 = vcmask 1045509
    %v528 = vsel %vm527, %v496, %v526
    %vm529 = vcmask 1046534
    %v530 = vsel %vm529, %v503, %v528
    %vm531 = vcmask 1047559
    %v532 = vsel %vm531, %v510, %v530
    %534 = vst.msk [vmem:[#allocation8] sm:$0xff] %vm86, %v532
    // Predicated region
    $region30: #{tpu_custom_call.1} parent=1 // pred_check
      _
    $region31: #{tpu_custom_call.1} parent=1 // pred_check_branch
      %536 = sbr.rel (0) target = $region33
    $region32: #{tpu_custom_call.1} parent=1 // pred_region
      %s538 = ssub.s32 128, 128
      %539 = vsyncadd [#allocation4], %s538
      %s541 = sshll.u32 [#allocation8], 4
      %s542 = int_to_ptr.vmem [resolvable:$true] %s541
      %544 = dma.vmem_to_hbm [thread:$0]  %s542, 128, %s4, [#allocation4]
    $region33: #{tpu_custom_call.1} parent=1 // pred_fallthru
      _
    // Predicated region
    $region34: #{tpu_custom_call.1} parent=1 // pred_check
      _
    $region35: #{tpu_custom_call.1} parent=1 // pred_check_branch
      %546 = sbr.rel (0) target = $region37
    $region36: #{tpu_custom_call.1} parent=1 // pred_region
      %547 = dma.done [#allocation4], 128
    $region37: #{tpu_custom_call.1} parent=1 // pred_fallthru
      _
    %548 = vsyncpa [#allocation3], 1
    %549 = vsyncpa [#allocation6], 1
    %550 = vsyncpa [#allocation4], 1

</llo_original>
